<compile_context>
chip_gen: v7x
topology: tpu7x:2x2x1
jax: 0.10.0
libtpu: 0.0.40
codegen_flags: <defaults>
</compile_context>

<pallas_src>
import math
import functools

import jax
import jax.numpy as jnp
from jax.experimental import pallas as pl
from jax.experimental.pallas import tpu as pltpu


def _round_up(x, m):
    return (x + m - 1) // m * m


def mlp_kernel(*refs, n_layers, bias_widths, bias_offsets, activation):
    """refs = (x_ref, w_0..w_{n-1}, b_all_ref, o_ref)."""
    x_ref = refs[0]
    w_refs = refs[1:1 + n_layers]
    b_ref = refs[1 + n_layers]
    o_ref = refs[2 + n_layers]

    y = x_ref[...]                                    # (TILE_M, in_feat) f32
    for i in range(n_layers):
        # x = activation(x); x = dropout(x); x = linear_i(x)
        if activation is not None:
            y = activation(y)
        # TODO(synk): nn.Dropout is treated as eval-mode identity (the module
        # default dropout=-1 is identity anyway).
        b = b_ref[:, bias_offsets[i]:bias_offsets[i] + bias_widths[i]]  # (1, fan_out)
        y = jnp.dot(y, w_refs[i][...],
                    preferred_element_type=jnp.float32) + b
    o_ref[...] = y.astype(o_ref.dtype)


@functools.partial(jax.jit, static_argnames=("activation", "tile_m"))
def mlp_forward(x, weights, biases, activation=None, tile_m=256):
    """weights[i]: (fan_in_i, fan_out_i)  (torch weight transposed);
       biases[i]:  (fan_out_i,)."""
    *lead, in_feat = x.shape
    out_feat = weights[-1].shape[1]
    m = 1
    for d in lead:
        m *= d
    x2 = x.reshape(m, in_feat)

    # Row tiling: pick the largest tile that fits the problem, pad rows up.
    tile_m = min(tile_m, _round_up(m, 8))
    m_pad = _round_up(m, tile_m)
    if m_pad != m:
        x2 = jnp.pad(x2, ((0, m_pad - m), (0, 0)))

    # Pack biases into one lane-aligned (1, N) array (single DMA descriptor).
    widths, offsets, segs, off = [], [], [], 0
    for b in biases:
        w = int(b.shape[-1])
        widths.append(w)
        offsets.append(off)
        pad = _round_up(w, 128)
        segs.append(jnp.pad(b.reshape(1, w), ((0, 0), (0, pad - w))))
        off += pad
    b_all = jnp.concatenate(segs, axis=-1)

    n_layers = len(weights)
    kernel = functools.partial(
        mlp_kernel,
        n_layers=n_layers,
        bias_widths=tuple(widths),
        bias_offsets=tuple(offsets),
        activation=activation,
    )

    in_specs = [pl.BlockSpec((tile_m, in_feat), lambda i: (i, 0))]
    for w in weights:                                   # weights resident in VMEM
        in_specs.append(pl.BlockSpec(w.shape, lambda i: (0, 0)))
    in_specs.append(pl.BlockSpec(b_all.shape, lambda i: (0, 0)))

    out = pl.pallas_call(
        kernel,
        out_shape=jax.ShapeDtypeStruct((m_pad, out_feat), x.dtype),
        grid=(m_pad // tile_m,),
        in_specs=in_specs,
        out_specs=pl.BlockSpec((tile_m, out_feat), lambda i: (i, 0)),
        compiler_params=pltpu.CompilerParams(
            dimension_semantics=("parallel",)),
    )(x2, *weights, b_all)

    if m_pad != m:
        out = out[:m]
    return out.reshape(*lead, out_feat)


if __name__ == "__main__":
    key = jax.random.PRNGKey(0)

    # MLP(in_feat=64, out_feat=128, hid_feat=(256, 128)); default activation
    # (identity) and dropout=-1 (identity). Small, TPU-friendly shapes.
    in_feat, hid_feat, out_feat = 64, (256, 128), 128
    dims = (in_feat,) + hid_feat + (out_feat,)

    keys = jax.random.split(key, 2 * (len(dims) - 1) + 1)
    weights, biases = [], []
    for i in range(len(dims) - 1):
        fan_in, fan_out = dims[i], dims[i + 1]
        bound = 1.0 / math.sqrt(fan_in)                 # torch.nn.Linear init range
        weights.append(jax.random.uniform(
            keys[2 * i], (fan_in, fan_out), jnp.float32, -bound, bound))
        biases.append(jax.random.uniform(
            keys[2 * i + 1], (fan_out,), jnp.float32, -bound, bound))

    x = jax.random.normal(keys[-1], (2, 256, in_feat), jnp.float32)

    out = mlp_forward(x, tuple(weights), tuple(biases))
    jax.block_until_ready(out)
    assert out.shape == (2, 256, out_feat)

    # plain-JAX reference (identity activation/dropout, chained linears)
    ref = x.reshape(-1, in_feat)
    for w, b in zip(weights, biases):
        ref = ref @ w + b
    ref = ref.reshape(2, 256, out_feat)
    assert jnp.allclose(out, ref, atol=1e-3, rtol=1e-3)

    print("KERNEL_OK")
</pallas_src>

<mosaic_0001>
module attributes {stable_mosaic.version = 11 : i64} {
  func.func @mlp_kernel(%arg0: i32, %arg1: memref<256x64xf32, #tpu.memory_space<vmem>>, %arg2: memref<64x256xf32, #tpu.memory_space<vmem>>, %arg3: memref<256x128xf32, #tpu.memory_space<vmem>>, %arg4: memref<128x128xf32, #tpu.memory_space<vmem>>, %arg5: memref<1x512xf32, #tpu.memory_space<vmem>>, %arg6: memref<256x128xf32, #tpu.memory_space<vmem>>) attributes {dimension_semantics = [#tpu.dimension_semantics<parallel>], iteration_bounds = array<i64: 2>, scalar_prefetch = 0 : i64, scratch_operands = 0 : i64, tpu.core_type = #tpu.core_type<tc>, window_params = [{transform_indices = @transform_0, window_bounds = array<i64: 256, 64>}, {pipeline_mode = #tpu.pipeline_mode<synchronous>, transform_indices = @transform_1, window_bounds = array<i64: 64, 256>}, {pipeline_mode = #tpu.pipeline_mode<synchronous>, transform_indices = @transform_2, window_bounds = array<i64: 256, 128>}, {pipeline_mode = #tpu.pipeline_mode<synchronous>, transform_indices = @transform_3, window_bounds = array<i64: 128, 128>}, {pipeline_mode = #tpu.pipeline_mode<synchronous>, transform_indices = @transform_4, window_bounds = array<i64: 1, 512>}, {transform_indices = @transform_5, window_bounds = array<i64: 256, 128>}]} {
    %c0 = arith.constant 0 : index
    %c0_0 = arith.constant 0 : index
    %0 = vector.load %arg1[%c0, %c0_0] : memref<256x64xf32, #tpu.memory_space<vmem>>, vector<256x64xf32>
    %c0_1 = arith.constant 0 : index
    %c0_2 = arith.constant 0 : index
    %1 = vector.load %arg5[%c0_1, %c0_2] : memref<1x512xf32, #tpu.memory_space<vmem>>, vector<1x256xf32>
    %c0_3 = arith.constant 0 : index
    %c0_4 = arith.constant 0 : index
    %2 = vector.load %arg2[%c0_3, %c0_4] : memref<64x256xf32, #tpu.memory_space<vmem>>, vector<64x256xf32>
    %cst = arith.constant dense<0.000000e+00> : vector<256x256xf32>
    %3 = tpu.matmul %0, %2, %cst {dimension_numbers = #tpu.dot_dimension_numbers<[1], [0], [0], [1], [0, 0, 1, 1], [], []>} : vector<256x64xf32>, vector<64x256xf32>, vector<256x256xf32> -> vector<256x256xf32>
    %4 = vector.broadcast %1 : vector<1x256xf32> to vector<256x256xf32>
    %5 = arith.addf %3, %4 : vector<256x256xf32>
    %c0_5 = arith.constant 0 : index
    %c256 = arith.constant 256 : index
    %6 = vector.load %arg5[%c0_5, %c256] : memref<1x512xf32, #tpu.memory_space<vmem>>, vector<1x128xf32>
    %c0_6 = arith.constant 0 : index
    %c0_7 = arith.constant 0 : index
    %7 = vector.load %arg3[%c0_6, %c0_7] : memref<256x128xf32, #tpu.memory_space<vmem>>, vector<256x128xf32>
    %cst_8 = arith.constant dense<0.000000e+00> : vector<256x128xf32>
    %8 = tpu.matmul %5, %7, %cst_8 {dimension_numbers = #tpu.dot_dimension_numbers<[1], [0], [0], [1], [0, 0, 1, 1], [], []>} : vector<256x256xf32>, vector<256x128xf32>, vector<256x128xf32> -> vector<256x128xf32>
    %9 = vector.broadcast %6 : vector<1x128xf32> to vector<256x128xf32>
    %10 = arith.addf %8, %9 : vector<256x128xf32>
    %c0_9 = arith.constant 0 : index
    %c384 = arith.constant 384 : index
    %11 = vector.load %arg5[%c0_9, %c384] : memref<1x512xf32, #tpu.memory_space<vmem>>, vector<1x128xf32>
    %c0_10 = arith.constant 0 : index
    %c0_11 = arith.constant 0 : index
    %12 = vector.load %arg4[%c0_10, %c0_11] : memref<128x128xf32, #tpu.memory_space<vmem>>, vector<128x128xf32>
    %cst_12 = arith.constant dense<0.000000e+00> : vector<256x128xf32>
    %13 = tpu.matmul %10, %12, %cst_12 {dimension_numbers = #tpu.dot_dimension_numbers<[1], [0], [0], [1], [0, 0, 1, 1], [], []>} : vector<256x128xf32>, vector<128x128xf32>, vector<256x128xf32> -> vector<256x128xf32>
    %14 = vector.broadcast %11 : vector<1x128xf32> to vector<256x128xf32>
    %15 = arith.addf %13, %14 : vector<256x128xf32>
    %c0_13 = arith.constant 0 : index
    %c0_14 = arith.constant 0 : index
    %16 = vector.load %arg6[%c0_13, %c0_14] : memref<256x128xf32, #tpu.memory_space<vmem>>, vector<256x128xf32>
    tpu.vector_store %arg6[%c0_13, %c0_14], %15 {strides = array<i32>} : memref<256x128xf32, #tpu.memory_space<vmem>>, vector<256x128xf32>,
    return
  }
  func.func @transform_0(%arg0: i32) -> (i32, i32) {
    %c0_i32 = arith.constant 0 : i32
    %c0_i32_0 = arith.constant 0 : i32
    return %arg0, %c0_i32 : i32, i32
  }
  func.func @transform_1(%arg0: i32) -> (i32, i32) {
    %c0_i32 = arith.constant 0 : i32
    %c0_i32_0 = arith.constant 0 : i32
    %c0_i32_1 = arith.constant 0 : i32
    return %c0_i32, %c0_i32_0 : i32, i32
  }
  func.func @transform_2(%arg0: i32) -> (i32, i32) {
    %c0_i32 = arith.constant 0 : i32
    %c0_i32_0 = arith.constant 0 : i32
    %c0_i32_1 = arith.constant 0 : i32
    return %c0_i32, %c0_i32_0 : i32, i32
  }
  func.func @transform_3(%arg0: i32) -> (i32, i32) {
    %c0_i32 = arith.constant 0 : i32
    %c0_i32_0 = arith.constant 0 : i32
    %c0_i32_1 = arith.constant 0 : i32
    return %c0_i32, %c0_i32_0 : i32, i32
  }
  func.func @transform_4(%arg0: i32) -> (i32, i32) {
    %c0_i32 = arith.constant 0 : i32
    %c0_i32_0 = arith.constant 0 : i32
    %c0_i32_1 = arith.constant 0 : i32
    return %c0_i32, %c0_i32_0 : i32, i32
  }
  func.func @transform_5(%arg0: i32) -> (i32, i32) {
    %c0_i32 = arith.constant 0 : i32
    %c0_i32_0 = arith.constant 0 : i32
    return %arg0, %c0_i32 : i32, i32
  }
}

</mosaic_0001>

<llo_original>
// kernel: mlp_forward.1
$region0: #{mlp_forward.1}
  #allocation0 [shape = 'u32[]', space=smem, size = 0x4, offset = 0x4, fixed_abs, tag = 'smem constant byte address 0x4 - core index']
  #allocation1 [shape = 'u32[144,128]{1,0:T(1,128)}', space=vmem, size = 0x12000, scoped, tag = 'internal scratch']
  %s0 = inlined_call_operand.vmem [shape: f32[512,64], index: 0, kind: input, shape index: {}]
  %s1 = inlined_call_operand.vmem [shape: f32[64,256], index: 1, kind: input, shape index: {}]
  %s2 = inlined_call_operand.vmem [shape: f32[256,128], index: 2, kind: input, shape index: {}]
  %s3 = inlined_call_operand.vmem [shape: f32[128,128], index: 3, kind: input, shape index: {}]
  %s4 = inlined_call_operand.vmem [shape: f32[1,512], index: 4, kind: input, shape index: {}]
  %s5 = inlined_call_operand.hbm [shape: f32[512,128], index: 5, kind: output, shape index: {}]
  %s6 = sld [smem:[#allocation0]]
  $region53: #{mlp_forward.1} parent=0
    _
  %s8 = ssub.s32 1, %s6
  %s9 = scalar_select 0, %s8, %s6
  $region1: #{mlp_forward.1} parent=0
    #allocation2 [shape = 'u8[262144]{0}', space=vmem, size = 0x40000, scoped, tag = 'output window, operand 0']
    #allocation3 [shape = 's32[2]{0}', space=sflag, size = 0x8, scoped, tag = 'scoped memory for mlp_forward.1']
    %10 = vsyncpa [#allocation3], 0
    %s11 = scalar_lea.sflag [#allocation3], 1
    %12 = vsyncpa %s11, 0
    loop: start=0, step=1, limit=4
    $region2: #{mlp_forward.1} parent=1 // loop_pre_header
      _
    $region3: #{mlp_forward.1} parent=1 // loop_header
      %s14 = sphi 0, %s18
      %p15 = scmp.ge.s32.totalorder %s14, 4
      %s24 = sphi 0, %s26
      %s27 = sphi 0, %s24
      %s28 = sphi 0, %s27
      %s44 = sphi 0, %s28
      %s48 = sphi 0, %s48
      %s50 = sphi 0, %s48
      %s51 = sphi 0, %s50
      %s65 = sphi 0, %s51
      %s69 = sphi 0, %s69
      %s71 = sphi 0, %s69
      %s72 = sphi 0, %s71
      %s86 = sphi 0, %s72
      %s90 = sphi 0, %s90
      %s92 = sphi 0, %s90
      %s93 = sphi 0, %s92
      %s107 = sphi 0, %s93
      %s111 = sphi 0, %s111
      %s113 = sphi 0, %s111
      %s114 = sphi 0, %s113
      %s128 = sphi 0, %s114
      %s134 = sphi 0, %s136
      %s137 = sphi 0, %s134
      %s138 = sphi 0, %s137
      %s154 = sphi 0, %s138
    $region4: #{mlp_forward.1} parent=1 // loop_header_branch
      %17 = sbr.rel (%p15) target = $region8
    $region5: #{mlp_forward.1} parent=1 // loop_body
      %s19 = ssub.s32 %s14, 1
      %s20 = ssub.s32 %s14, 2
      %s21 = sadd.s32 %s14, 1
      %s22 = ssub.s32 %s14, %s21
      %p23 = scmp.eq.s32.totalorder %s22, 0
      %s25 = sadd.s32 %s24, 1
      %s26 = scalar_select %p23, %s24, %s25
      %p29 = pneg %p23
      %p30 = scmp.eq.s32.totalorder %s14, 1
      %p31 = por %p29, %p30
      %p32 = scmp.ne.s32.totalorder %s24, %s27
      %p33 = scmp.eq.s32.totalorder %s14, 0
      %p34 = por %p32, %p33
      %p35 = scmp.ne.s32.totalorder %s24, %s27
      %p36 = scmp.eq.s32.totalorder %s19, 1
      %p37 = por %p35, %p36
      %p38 = scmp.ne.s32.totalorder %s27, %s28
      %p39 = scmp.eq.s32.totalorder %s19, 0
      %p40 = por %p38, %p39
      %p41 = scmp.ne.s32.totalorder %s27, %s28
      %p42 = scmp.eq.s32.totalorder %s20, 1
      %p43 = por %p41, %p42
      %p45 = scmp.ne.s32.totalorder %s28, %s44
      %p46 = scmp.eq.s32.totalorder %s20, 0
      %p47 = por %p45, %p46
      %s49 = sadd.s32 %s48, 1
      %p52 = scmp.eq.s32.totalorder %s14, 1
      %p53 = scmp.ne.s32.totalorder %s48, %s50
      %p54 = scmp.eq.s32.totalorder %s14, 0
      %p55 = por %p53, %p54
      %p56 = scmp.ne.s32.totalorder %s48, %s50
      %p57 = scmp.eq.s32.totalorder %s19, 1
      %p58 = por %p56, %p57
      %p59 = scmp.ne.s32.totalorder %s50, %s51
      %p60 = scmp.eq.s32.totalorder %s19, 0
      %p61 = por %p59, %p60
      %p62 = scmp.ne.s32.totalorder %s50, %s51
      %p63 = scmp.eq.s32.totalorder %s20, 1
      %p64 = por %p62, %p63
      %p66 = scmp.ne.s32.totalorder %s51, %s65
      %p67 = scmp.eq.s32.totalorder %s20, 0
      %p68 = por %p66, %p67
      %s70 = sadd.s32 %s69, 1
      %p73 = scmp.eq.s32.totalorder %s14, 1
      %p74 = scmp.ne.s32.totalorder %s69, %s71
      %p75 = scmp.eq.s32.totalorder %s14, 0
      %p76 = por %p74, %p75
      %p77 = scmp.ne.s32.totalorder %s69, %s71
      %p78 = scmp.eq.s32.totalorder %s19, 1
      %p79 = por %p77, %p78
      %p80 = scmp.ne.s32.totalorder %s71, %s72
      %p81 = scmp.eq.s32.totalorder %s19, 0
      %p82 = por %p80, %p81
      %p83 = scmp.ne.s32.totalorder %s71, %s72
      %p84 = scmp.eq.s32.totalorder %s20, 1
      %p85 = por %p83, %p84
      %p87 = scmp.ne.s32.totalorder %s72, %s86
      %p88 = scmp.eq.s32.totalorder %s20, 0
      %p89 = por %p87, %p88
      %s91 = sadd.s32 %s90, 1
      %p94 = scmp.eq.s32.totalorder %s14, 1
      %p95 = scmp.ne.s32.totalorder %s90, %s92
      %p96 = scmp.eq.s32.totalorder %s14, 0
      %p97 = por %p95, %p96
      %p98 = scmp.ne.s32.totalorder %s90, %s92
      %p99 = scmp.eq.s32.totalorder %s19, 1
      %p100 = por %p98, %p99
      %p101 = scmp.ne.s32.totalorder %s92, %s93
      %p102 = scmp.eq.s32.totalorder %s19, 0
      %p103 = por %p101, %p102
      %p104 = scmp.ne.s32.totalorder %s92, %s93
      %p105 = scmp.eq.s32.totalorder %s20, 1
      %p106 = por %p104, %p105
      %p108 = scmp.ne.s32.totalorder %s93, %s107
      %p109 = scmp.eq.s32.totalorder %s20, 0
      %p110 = por %p108, %p109
      %s112 = sadd.s32 %s111, 1
      %p115 = scmp.eq.s32.totalorder %s14, 1
      %p116 = scmp.ne.s32.totalorder %s111, %s113
      %p117 = scmp.eq.s32.totalorder %s14, 0
      %p118 = por %p116, %p117
      %p119 = scmp.ne.s32.totalorder %s111, %s113
      %p120 = scmp.eq.s32.totalorder %s19, 1
      %p121 = por %p119, %p120
      %p122 = scmp.ne.s32.totalorder %s113, %s114
      %p123 = scmp.eq.s32.totalorder %s19, 0
      %p124 = por %p122, %p123
      %p125 = scmp.ne.s32.totalorder %s113, %s114
      %p126 = scmp.eq.s32.totalorder %s20, 1
      %p127 = por %p125, %p126
      %p129 = scmp.ne.s32.totalorder %s114, %s128
      %p130 = scmp.eq.s32.totalorder %s20, 0
      %p131 = por %p129, %p130
      %s132 = ssub.s32 %s14, %s21
      %p133 = scmp.eq.s32.totalorder %s132, 0
      %s135 = sadd.s32 %s134, 1
      %s136 = scalar_select %p133, %s134, %s135
      %p139 = pneg %p133
      %p140 = scmp.eq.s32.totalorder %s14, 1
      %p141 = por %p139, %p140
      %p142 = scmp.ne.s32.totalorder %s134, %s137
      %p143 = scmp.eq.s32.totalorder %s14, 0
      %p144 = por %p142, %p143
      %p145 = scmp.ne.s32.totalorder %s134, %s137
      %p146 = scmp.eq.s32.totalorder %s19, 1
      %p147 = por %p145, %p146
      %p148 = scmp.ne.s32.totalorder %s137, %s138
      %p149 = scmp.eq.s32.totalorder %s19, 0
      %p150 = por %p148, %p149
      %p151 = scmp.ne.s32.totalorder %s137, %s138
      %p152 = scmp.eq.s32.totalorder %s20, 1
      %p153 = por %p151, %p152
      %p155 = scmp.ne.s32.totalorder %s138, %s154
      %p156 = scmp.eq.s32.totalorder %s20, 0
      %p157 = por %p155, %p156
      %p158 = scmp.le.s32.totalorder 1, %s14
      %p159 = scmp.lt.s32.totalorder %s14, 3
      %p160 = pnand %p158, %p159
      %p161 = pneg %p160
      // Predicated region
      $region9: #{mlp_forward.1} parent=5 // pred_check
        _
      $region10: #{mlp_forward.1} parent=5 // pred_check_branch
        %163 = sbr.rel (%p160) target = $region12
      $region11: #{mlp_forward.1} parent=5 // pred_region
        %s164 = ssub.s32 %s14, 1
        // Predicated region
        $region13: #{mlp_forward.1} parent=11 // pred_check
          %p165 = pneg %p61
        $region14: #{mlp_forward.1} parent=11 // pred_check_branch
          %167 = sbr.rel (%p165) target = $region16
        $region15: #{mlp_forward.1} parent=11 // pred_region
          _
        $region16: #{mlp_forward.1} parent=11 // pred_fallthru
          _
        // Predicated region
        $region17: #{mlp_forward.1} parent=11 // pred_check
          %p168 = pneg %p82
        $region18: #{mlp_forward.1} parent=11 // pred_check_branch
          %170 = sbr.rel (%p168) target = $region20
        $region19: #{mlp_forward.1} parent=11 // pred_region
          _
        $region20: #{mlp_forward.1} parent=11 // pred_fallthru
          _
        // Predicated region
        $region21: #{mlp_forward.1} parent=11 // pred_check
          %p171 = pneg %p103
        $region22: #{mlp_forward.1} parent=11 // pred_check_branch
          %173 = sbr.rel (%p171) target = $region24
        $region23: #{mlp_forward.1} parent=11 // pred_region
          _
        $region24: #{mlp_forward.1} parent=11 // pred_fallthru
          _
        // Predicated region
        $region25: #{mlp_forward.1} parent=11 // pred_check
          %p174 = pneg %p124
        $region26: #{mlp_forward.1} parent=11 // pred_check_branch
          %176 = sbr.rel (%p174) target = $region28
        $region27: #{mlp_forward.1} parent=11 // pred_region
          _
        $region28: #{mlp_forward.1} parent=11 // pred_fallthru
          _
      $region12: #{mlp_forward.1} parent=5 // pred_fallthru
        _
      %p177 = scmp.lt.s32.totalorder %s14, 2
      // Predicated region
      $region29: #{mlp_forward.1} parent=5 // pred_check
        %p178 = pneg %p177
      $region30: #{mlp_forward.1} parent=5 // pred_check_branch
        %180 = sbr.rel (%p178) target = $region32
      $region31: #{mlp_forward.1} parent=5 // pred_region
        // Predicated region
        $region33: #{mlp_forward.1} parent=31 // pred_check
          %p181 = pneg %p34
        $region34: #{mlp_forward.1} parent=31 // pred_check_branch
          %183 = sbr.rel (%p181) target = $region36
        $region35: #{mlp_forward.1} parent=31 // pred_region
          %s184 = smul.u32 32, %s14
          %p185 = scmp.lt.s32.totalorder %s184, 63
          %s186 = scalar_select %p185, %s184, 63
          %s187 = smul.addr %s186, 8
          %s188 = scalar_lea.vmem %s0, %s187
          %s189 = smul.u32 32, %s14
        $region36: #{mlp_forward.1} parent=31 // pred_fallthru
          _
      $region32: #{mlp_forward.1} parent=5 // pred_fallthru
        _
      %p190 = scmp.le.s32.totalorder 1, %s14
      %p191 = scmp.lt.s32.totalorder %s14, 3
      %p192 = pnand %p190, %p191
      %p193 = pneg %p192
      // Predicated region
      $region37: #{mlp_forward.1} parent=5 // pred_check
        _
      $region38: #{mlp_forward.1} parent=5 // pred_check_branch
        %195 = sbr.rel (%p192) target = $region40
      $region39: #{mlp_forward.1} parent=5 // pred_region
        %s196 = ssub.s32 %s14, 1
        %s197 = smul.u32 32, %s19
        %p198 = scmp.lt.s32.totalorder %s197, 63
        %s199 = scalar_select %p198, %s197, 63
        %s200 = smul.addr %s199, 8
        %s201 = scalar_lea.vmem %s0, %s200
        %p202 = pneg %p40
        %p203 = pneg %p37
        %p204 = pneg %p61
        %p205 = pneg %p58
        %p206 = pneg %p82
        %p207 = pneg %p79
        %p208 = pneg %p103
        %p209 = pneg %p100
        %p210 = pneg %p124
        %p211 = pneg %p121
        %p212 = pneg %p150
        %p213 = pneg %p147
        %s214 = sand.u32 %s137, 1
        %s215 = scalar_lea.sflag [#allocation3], %s214
        %s216 = sand.u32 %s137, 1
        %s217 = smul.addr %s216, 256
        %s218 = scalar_lea.vmem [#allocation2], %s217
        %s219 = smul.u32 32, %s19
        %p220 = scmp.lt.s32.totalorder %s219, 63
        %s221 = scalar_select %p220, %s219, 63
        %s222 = smul.addr %s221, 8
        %s223 = scalar_lea.vmem %s0, %s222
        %s224 = smul.u32 32, %s19
        %s225 = smul.u32 32, %s19
        %v226 = vld [vmem:[%s223] sm:$0xff]
        %v227 = vld [vmem:[%s223 + $0x8] sm:$0xff]
        %v228 = vld [vmem:[%s223 + $0x10] sm:$0xff]
        %v229 = vld [vmem:[%s223 + $0x18] sm:$0xff]
        %v230 = vld [vmem:[%s223 + $0x20] sm:$0xff]
        %v231 = vld [vmem:[%s223 + $0x28] sm:$0xff]
        %v232 = vld [vmem:[%s223 + $0x30] sm:$0xff]
        %v233 = vld [vmem:[%s223 + $0x38] sm:$0xff]
        %v234 = vld [vmem:[%s223 + $0x40] sm:$0xff]
        %v235 = vld [vmem:[%s223 + $0x48] sm:$0xff]
        %v236 = vld [vmem:[%s223 + $0x50] sm:$0xff]
        %v237 = vld [vmem:[%s223 + $0x58] sm:$0xff]
        %v238 = vld [vmem:[%s223 + $0x60] sm:$0xff]
        %v239 = vld [vmem:[%s223 + $0x68] sm:$0xff]
        %v240 = vld [vmem:[%s223 + $0x70] sm:$0xff]
        %v241 = vld [vmem:[%s223 + $0x78] sm:$0xff]
        %v242 = vld [vmem:[%s223 + $0x80] sm:$0xff]
        %v243 = vld [vmem:[%s223 + $0x88] sm:$0xff]
        %v244 = vld [vmem:[%s223 + $0x90] sm:$0xff]
        %v245 = vld [vmem:[%s223 + $0x98] sm:$0xff]
        %v246 = vld [vmem:[%s223 + $0xa0] sm:$0xff]
        %v247 = vld [vmem:[%s223 + $0xa8] sm:$0xff]
        %v248 = vld [vmem:[%s223 + $0xb0] sm:$0xff]
        %v249 = vld [vmem:[%s223 + $0xb8] sm:$0xff]
        %v250 = vld [vmem:[%s223 + $0xc0] sm:$0xff]
        %v251 = vld [vmem:[%s223 + $0xc8] sm:$0xff]
        %v252 = vld [vmem:[%s223 + $0xd0] sm:$0xff]
        %v253 = vld [vmem:[%s223 + $0xd8] sm:$0xff]
        %v254 = vld [vmem:[%s223 + $0xe0] sm:$0xff]
        %v255 = vld [vmem:[%s223 + $0xe8] sm:$0xff]
        %v256 = vld [vmem:[%s223 + $0xf0] sm:$0xff]
        %v257 = vld [vmem:[%s223 + $0xf8] sm:$0xff]
        %v258 = vld [vmem:[%s4] sm:$0x3]
        %v259 = vld [vmem:[%s1] sm:$0xff]
        %v260 = vld [vmem:[%s1 + $0x8] sm:$0xff]
        %v261 = vld [vmem:[%s1 + $0x10] sm:$0xff]
        %v262 = vld [vmem:[%s1 + $0x18] sm:$0xff]
        %v263 = vld [vmem:[%s1 + $0x20] sm:$0xff]
        %v264 = vld [vmem:[%s1 + $0x28] sm:$0xff]
        %v265 = vld [vmem:[%s1 + $0x30] sm:$0xff]
        %v266 = vld [vmem:[%s1 + $0x38] sm:$0xff]
        %v267 = vld [vmem:[%s1 + $0x40] sm:$0xff]
        %v268 = vld [vmem:[%s1 + $0x48] sm:$0xff]
        %v269 = vld [vmem:[%s1 + $0x50] sm:$0xff]
        %v270 = vld [vmem:[%s1 + $0x58] sm:$0xff]
        %v271 = vld [vmem:[%s1 + $0x60] sm:$0xff]
        %v272 = vld [vmem:[%s1 + $0x68] sm:$0xff]
        %v273 = vld [vmem:[%s1 + $0x70] sm:$0xff]
        %v274 = vld [vmem:[%s1 + $0x78] sm:$0xff]
        %v276 = vlaneseq
        %v277 = vshrl.u32 %v276, 7
        %v278 = vsub.s32 0, %v277
        %v279 = vrot.slane %v258, %v278
        %v280 = vlaneseq
        %v281 = vshrl.u32 %v280, 7
        %v282 = vsub.s32 1, %v281
        %v283 = vrot.slane %v258, %v282
        %vm286 = vcmask 523264
        %v288 = vsel %vm286, %v226, 0
        %v291 = vsel %vm286, %v227, 0
        %v294 = vsel %vm286, %v228, 0
        %v297 = vsel %vm286, %v229, 0
        %v300 = vsel %vm286, %v230, 0
        %v303 = vsel %vm286, %v231, 0
        %v306 = vsel %vm286, %v232, 0
        %v309 = vsel %vm286, %v233, 0
        %v312 = vsel %vm286, %v234, 0
        %v315 = vsel %vm286, %v235, 0
        %v318 = vsel %vm286, %v236, 0
        %v321 = vsel %vm286, %v237, 0
        %v324 = vsel %vm286, %v238, 0
        %v327 = vsel %vm286, %v239, 0
        %v330 = vsel %vm286, %v240, 0
        %v333 = vsel %vm286, %v241, 0
        %v336 = vsel %vm286, %v242, 0
        %v339 = vsel %vm286, %v243, 0
        %v342 = vsel %vm286, %v244, 0
        %v345 = vsel %vm286, %v245, 0
        %v348 = vsel %vm286, %v246, 0
        %v351 = vsel %vm286, %v247, 0
        %v354 = vsel %vm286, %v248, 0
        %v357 = vsel %vm286, %v249, 0
        %v360 = vsel %vm286, %v250, 0
        %v363 = vsel %vm286, %v251, 0
        %v366 = vsel %vm286, %v252, 0
        %v369 = vsel %vm286, %v253, 0
        %v372 = vsel %vm286, %v254, 0
        %v375 = vsel %vm286, %v255, 0
        %v378 = vsel %vm286, %v256, 0
        %v381 = vsel %vm286, %v257, 0
        %383 = vmatprep.subr.mxu0 %v260
        %384 = vmatpush1.msra.mxu0 %v259
        %385 = vmatprep.subr.mxu0 %v262
        %386 = vmatpush1.msra.mxu0 %v261
        %387 = vmatprep.subr.mxu0 %v264
        %388 = vmatpush1.msra.mxu0 %v263
        %389 = vmatprep.subr.mxu0 %v266
        %390 = vmatpush1.msra.mxu0 %v265
        %391 = vmatprep.subr.mxu0 %v268
        %392 = vmatpush1.msra.mxu0 %v267
        %393 = vmatprep.subr.mxu0 %v270
        %394 = vmatpush1.msra.mxu0 %v269
        %395 = vmatprep.subr.mxu0 %v272
        %396 = vmatpush1.msra.mxu0 %v271
        %397 = vmatprep.subr.mxu0 %v274
        %398 = vmatpush1.msra.mxu0 %v273
        %399 = vmatprep.subr.mxu0 0.0
        %400 = vmatpush1.msra.mxu0 0.0
        %401 = vmatprep.subr.mxu0 0.0
        %402 = vmatpush1.msra.mxu0 0.0
        %403 = vmatprep.subr.mxu0 0.0
        %404 = vmatpush1.msra.mxu0 0.0
        %405 = vmatprep.subr.mxu0 0.0
        %406 = vmatpush1.msra.mxu0 0.0
        %407 = vmatprep.subr.mxu0 0.0
        %408 = vmatpush1.msra.mxu0 0.0
        %409 = vmatprep.subr.mxu0 0.0
        %410 = vmatpush1.msra.mxu0 0.0
        %411 = vmatprep.subr.mxu0 0.0
        %412 = vmatpush1.msra.mxu0 0.0
        %413 = vmatprep.subr.mxu0 0.0
        %414 = vmatpush1.msra.mxu0 0.0
        %415 = vmatprep.subr.mxu0 0.0
        %416 = vmatpush1.msra.mxu0 0.0
        %417 = vmatprep.subr.mxu0 0.0
        %418 = vmatpush1.msra.mxu0 0.0
        %419 = vmatprep.subr.mxu0 0.0
        %420 = vmatpush1.msra.mxu0 0.0
        %421 = vmatprep.subr.mxu0 0.0
        %422 = vmatpush1.msra.mxu0 0.0
        %423 = vmatprep.subr.mxu0 0.0
        %424 = vmatpush1.msra.mxu0 0.0
        %425 = vmatprep.subr.mxu0 0.0
        %426 = vmatpush1.msra.mxu0 0.0
        %427 = vmatprep.subr.mxu0 0.0
        %428 = vmatpush1.msra.mxu0 0.0
        %429 = vmatprep.subr.mxu0 0.0
        %430 = vmatpush1.msra.mxu0 0.0
        %431 = vmatprep.subr.mxu0 0.0
        %432 = vmatpush1.msra.mxu0 0.0
        %433 = vmatprep.subr.mxu0 0.0
        %434 = vmatpush1.msra.mxu0 0.0
        %435 = vmatprep.subr.mxu0 0.0
        %436 = vmatpush1.msra.mxu0 0.0
        %437 = vmatprep.subr.mxu0 0.0
        %438 = vmatpush1.msra.mxu0 0.0
        %439 = vmatprep.subr.mxu0 0.0
        %440 = vmatpush1.msra.mxu0 0.0
        %441 = vmatprep.subr.mxu0 0.0
        %442 = vmatpush1.msra.mxu0 0.0
        %443 = vmatprep.subr.mxu0 0.0
        %444 = vmatpush1.msra.mxu0 0.0
        %445 = vmatprep.subr.mxu0 0.0
        %446 = vmatpush1.msra.mxu0 0.0
        %447 = vmatprep.mubr.f32.mxu0 0.0
        %448 = vmatmul.mubr.f32.gmra.mrb[0].mxu0 %v288
        %v449 = vpop.f32.mrb[0].mxu0
        %v450 = vadd.f32 %v279, %v449
        %v451 = vpop.f32.mrb[0].mxu0
        %v452 = vadd.f32 %v283, %v451
        %453 = vmatprep.mubr.f32.mxu0 0.0
        %454 = vmatmul.mubr.f32.gmra.mrb[0].mxu0 %v291
        %v455 = vpop.f32.mrb[0].mxu0
        %v456 = vadd.f32 %v279, %v455
        %v457 = vpop.f32.mrb[0].mxu0
        %v458 = vadd.f32 %v283, %v457
        %459 = vmatprep.mubr.f32.mxu0 0.0
        %460 = vmatmul.mubr.f32.gmra.mrb[0].mxu0 %v294
        %v461 = vpop.f32.mrb[0].mxu0
        %v462 = vadd.f32 %v279, %v461
        %v463 = vpop.f32.mrb[0].mxu0
        %v464 = vadd.f32 %v283, %v463
        %465 = vmatprep.mubr.f32.mxu0 0.0
        %466 = vmatmul.mubr.f32.gmra.mrb[0].mxu0 %v297
        %v467 = vpop.f32.mrb[0].mxu0
        %v468 = vadd.f32 %v279, %v467
        %v469 = vpop.f32.mrb[0].mxu0
        %v470 = vadd.f32 %v283, %v469
        %471 = vmatprep.mubr.f32.mxu0 0.0
        %472 = vmatmul.mubr.f32.gmra.mrb[0].mxu0 %v300
        %v473 = vpop.f32.mrb[0].mxu0
        %v474 = vadd.f32 %v279, %v473
        %v475 = vpop.f32.mrb[0].mxu0
        %v476 = vadd.f32 %v283, %v475
        %477 = vmatprep.mubr.f32.mxu0 0.0
        %478 = vmatmul.mubr.f32.gmra.mrb[0].mxu0 %v303
        %v479 = vpop.f32.mrb[0].mxu0
        %v480 = vadd.f32 %v279, %v479
        %v481 = vpop.f32.mrb[0].mxu0
        %v482 = vadd.f32 %v283, %v481
        %483 = vmatprep.mubr.f32.mxu0 0.0
        %484 = vmatmul.mubr.f32.gmra.mrb[0].mxu0 %v306
        %v485 = vpop.f32.mrb[0].mxu0
        %v486 = vadd.f32 %v279, %v485
        %v487 = vpop.f32.mrb[0].mxu0
        %v488 = vadd.f32 %v283, %v487
        %489 = vmatprep.mubr.f32.mxu0 0.0
        %490 = vmatmul.mubr.f32.gmra.mrb[0].mxu0 %v309
        %v491 = vpop.f32.mrb[0].mxu0
        %v492 = vadd.f32 %v279, %v491
        %v493 = vpop.f32.mrb[0].mxu0
        %v494 = vadd.f32 %v283, %v493
        %495 = vmatprep.mubr.f32.mxu0 0.0
        %496 = vmatmul.mubr.f32.gmra.mrb[0].mxu0 %v312
        %v497 = vpop.f32.mrb[0].mxu0
        %v498 = vadd.f32 %v279, %v497
        %v499 = vpop.f32.mrb[0].mxu0
        %v500 = vadd.f32 %v283, %v499
        %501 = vmatprep.mubr.f32.mxu0 0.0
        %502 = vmatmul.mubr.f32.gmra.mrb[0].mxu0 %v315
        %v503 = vpop.f32.mrb[0].mxu0
        %v504 = vadd.f32 %v279, %v503
        %v505 = vpop.f32.mrb[0].mxu0
        %v506 = vadd.f32 %v283, %v505
        %507 = vmatprep.mubr.f32.mxu0 0.0
        %508 = vmatmul.mubr.f32.gmra.mrb[0].mxu0 %v318
        %v509 = vpop.f32.mrb[0].mxu0
        %v510 = vadd.f32 %v279, %v509
        %v511 = vpop.f32.mrb[0].mxu0
        %v512 = vadd.f32 %v283, %v511
        %513 = vmatprep.mubr.f32.mxu0 0.0
        %514 = vmatmul.mubr.f32.gmra.mrb[0].mxu0 %v321
        %v515 = vpop.f32.mrb[0].mxu0
        %v516 = vadd.f32 %v279, %v515
        %v517 = vpop.f32.mrb[0].mxu0
        %v518 = vadd.f32 %v283, %v517
        %519 = vmatprep.mubr.f32.mxu0 0.0
        %520 = vmatmul.mubr.f32.gmra.mrb[0].mxu0 %v324
        %v521 = vpop.f32.mrb[0].mxu0
        %v522 = vadd.f32 %v279, %v521
        %v523 = vpop.f32.mrb[0].mxu0
        %v524 = vadd.f32 %v283, %v523
        %525 = vmatprep.mubr.f32.mxu0 0.0
        %526 = vmatmul.mubr.f32.gmra.mrb[0].mxu0 %v327
        %v527 = vpop.f32.mrb[0].mxu0
        %v528 = vadd.f32 %v279, %v527
        %v529 = vpop.f32.mrb[0].mxu0
        %v530 = vadd.f32 %v283, %v529
        %531 = vmatprep.mubr.f32.mxu0 0.0
        %532 = vmatmul.mubr.f32.gmra.mrb[0].mxu0 %v330
        %v533 = vpop.f32.mrb[0].mxu0
        %v534 = vadd.f32 %v279, %v533
        %v535 = vpop.f32.mrb[0].mxu0
        %v536 = vadd.f32 %v283, %v535
        %537 = vmatprep.mubr.f32.mxu0 0.0
        %538 = vmatmul.mubr.f32.gmra.mrb[0].mxu0 %v333
        %v539 = vpop.f32.mrb[0].mxu0
        %v540 = vadd.f32 %v279, %v539
        %v541 = vpop.f32.mrb[0].mxu0
        %v542 = vadd.f32 %v283, %v541
        %543 = vmatprep.mubr.f32.mxu0 0.0
        %544 = vmatmul.mubr.f32.gmra.mrb[0].mxu0 %v336
        %v545 = vpop.f32.mrb[0].mxu0
        %v546 = vadd.f32 %v279, %v545
        %v547 = vpop.f32.mrb[0].mxu0
        %v548 = vadd.f32 %v283, %v547
        %549 = vmatprep.mubr.f32.mxu0 0.0
        %550 = vmatmul.mubr.f32.gmra.mrb[0].mxu0 %v339
        %v551 = vpop.f32.mrb[0].mxu0
        %v552 = vadd.f32 %v279, %v551
        %v553 = vpop.f32.mrb[0].mxu0
        %v554 = vadd.f32 %v283, %v553
        %555 = vmatprep.mubr.f32.mxu0 0.0
        %556 = vmatmul.mubr.f32.gmra.mrb[0].mxu0 %v342
        %v557 = vpop.f32.mrb[0].mxu0
        %v558 = vadd.f32 %v279, %v557
        %v559 = vpop.f32.mrb[0].mxu0
        %v560 = vadd.f32 %v283, %v559
        %561 = vmatprep.mubr.f32.mxu0 0.0
        %562 = vmatmul.mubr.f32.gmra.mrb[0].mxu0 %v345
        %v563 = vpop.f32.mrb[0].mxu0
        %v564 = vadd.f32 %v279, %v563
        %v565 = vpop.f32.mrb[0].mxu0
        %v566 = vadd.f32 %v283, %v565
        %567 = vmatprep.mubr.f32.mxu0 0.0
        %568 = vmatmul.mubr.f32.gmra.mrb[0].mxu0 %v348
        %v569 = vpop.f32.mrb[0].mxu0
        %v570 = vadd.f32 %v279, %v569
        %v571 = vpop.f32.mrb[0].mxu0
        %v572 = vadd.f32 %v283, %v571
        %573 = vmatprep.mubr.f32.mxu0 0.0
        %574 = vmatmul.mubr.f32.gmra.mrb[0].mxu0 %v351
        %v575 = vpop.f32.mrb[0].mxu0
        %v576 = vadd.f32 %v279, %v575
        %v577 = vpop.f32.mrb[0].mxu0
        %v578 = vadd.f32 %v283, %v577
        %579 = vmatprep.mubr.f32.mxu0 0.0
        %580 = vmatmul.mubr.f32.gmra.mrb[0].mxu0 %v354
        %v581 = vpop.f32.mrb[0].mxu0
        %v582 = vadd.f32 %v279, %v581
        %v583 = vpop.f32.mrb[0].mxu0
        %v584 = vadd.f32 %v283, %v583
        %585 = vmatprep.mubr.f32.mxu0 0.0
        %586 = vmatmul.mubr.f32.gmra.mrb[0].mxu0 %v357
        %v587 = vpop.f32.mrb[0].mxu0
        %v588 = vadd.f32 %v279, %v587
        %v589 = vpop.f32.mrb[0].mxu0
        %v590 = vadd.f32 %v283, %v589
        %591 = vmatprep.mubr.f32.mxu0 0.0
        %592 = vmatmul.mubr.f32.gmra.mrb[0].mxu0 %v360
        %v593 = vpop.f32.mrb[0].mxu0
        %v594 = vadd.f32 %v279, %v593
        %v595 = vpop.f32.mrb[0].mxu0
        %v596 = vadd.f32 %v283, %v595
        %597 = vmatprep.mubr.f32.mxu0 0.0
        %598 = vmatmul.mubr.f32.gmra.mrb[0].mxu0 %v363
        %v599 = vpop.f32.mrb[0].mxu0
        %v600 = vadd.f32 %v279, %v599
        %v601 = vpop.f32.mrb[0].mxu0
        %v602 = vadd.f32 %v283, %v601
        %603 = vmatprep.mubr.f32.mxu0 0.0
        %604 = vmatmul.mubr.f32.gmra.mrb[0].mxu0 %v366
        %v605 = vpop.f32.mrb[0].mxu0
        %v606 = vadd.f32 %v279, %v605
        %v607 = vpop.f32.mrb[0].mxu0
        %v608 = vadd.f32 %v283, %v607
        %609 = vmatprep.mubr.f32.mxu0 0.0
        %610 = vmatmul.mubr.f32.gmra.mrb[0].mxu0 %v369
        %v611 = vpop.f32.mrb[0].mxu0
        %v612 = vadd.f32 %v279, %v611
        %v613 = vpop.f32.mrb[0].mxu0
        %v614 = vadd.f32 %v283, %v613
        %615 = vmatprep.mubr.f32.mxu0 0.0
        %616 = vmatmul.mubr.f32.gmra.mrb[0].mxu0 %v372
        %v617 = vpop.f32.mrb[0].mxu0
        %v618 = vadd.f32 %v279, %v617
        %v619 = vpop.f32.mrb[0].mxu0
        %v620 = vadd.f32 %v283, %v619
        %621 = vmatprep.mubr.f32.mxu0 0.0
        %622 = vmatmul.mubr.f32.gmra.mrb[0].mxu0 %v375
        %v623 = vpop.f32.mrb[0].mxu0
        %v624 = vadd.f32 %v279, %v623
        %v625 = vpop.f32.mrb[0].mxu0
        %v626 = vadd.f32 %v283, %v625
        %627 = vmatprep.mubr.f32.mxu0 0.0
        %628 = vmatmul.mubr.f32.gmra.mrb[0].mxu0 %v378
        %v629 = vpop.f32.mrb[0].mxu0
        %v630 = vadd.f32 %v279, %v629
        %v631 = vpop.f32.mrb[0].mxu0
        %v632 = vadd.f32 %v283, %v631
        %633 = vmatprep.mubr.f32.mxu0 0.0
        %634 = vmatmul.mubr.f32.gmra.mrb[0].mxu0 %v381
        %v635 = vpop.f32.mrb[0].mxu0
        %v636 = vadd.f32 %v279, %v635
        %v637 = vpop.f32.mrb[0].mxu0
        %v638 = vadd.f32 %v283, %v637
        %639 = vdwg.mxu0
        %v640 = vld [vmem:[%s4 + $0x2] sm:$0x1]
        %v641 = vld [vmem:[%s2] sm:$0xff]
        %v642 = vld [vmem:[%s2 + $0x8] sm:$0xff]
        %v643 = vld [vmem:[%s2 + $0x10] sm:$0xff]
        %v644 = vld [vmem:[%s2 + $0x18] sm:$0xff]
        %v645 = vld [vmem:[%s2 + $0x20] sm:$0xff]
        %v646 = vld [vmem:[%s2 + $0x28] sm:$0xff]
        %v647 = vld [vmem:[%s2 + $0x30] sm:$0xff]
        %v648 = vld [vmem:[%s2 + $0x38] sm:$0xff]
        %v649 = vld [vmem:[%s2 + $0x40] sm:$0xff]
        %v650 = vld [vmem:[%s2 + $0x48] sm:$0xff]
        %v651 = vld [vmem:[%s2 + $0x50] sm:$0xff]
        %v652 = vld [vmem:[%s2 + $0x58] sm:$0xff]
        %v653 = vld [vmem:[%s2 + $0x60] sm:$0xff]
        %v654 = vld [vmem:[%s2 + $0x68] sm:$0xff]
        %v655 = vld [vmem:[%s2 + $0x70] sm:$0xff]
        %v656 = vld [vmem:[%s2 + $0x78] sm:$0xff]
        %v657 = vld [vmem:[%s2 + $0x80] sm:$0xff]
        %v658 = vld [vmem:[%s2 + $0x88] sm:$0xff]
        %v659 = vld [vmem:[%s2 + $0x90] sm:$0xff]
        %v660 = vld [vmem:[%s2 + $0x98] sm:$0xff]
        %v661 = vld [vmem:[%s2 + $0xa0] sm:$0xff]
        %v662 = vld [vmem:[%s2 + $0xa8] sm:$0xff]
        %v663 = vld [vmem:[%s2 + $0xb0] sm:$0xff]
        %v664 = vld [vmem:[%s2 + $0xb8] sm:$0xff]
        %v665 = vld [vmem:[%s2 + $0xc0] sm:$0xff]
        %v666 = vld [vmem:[%s2 + $0xc8] sm:$0xff]
        %v667 = vld [vmem:[%s2 + $0xd0] sm:$0xff]
        %v668 = vld [vmem:[%s2 + $0xd8] sm:$0xff]
        %v669 = vld [vmem:[%s2 + $0xe0] sm:$0xff]
        %v670 = vld [vmem:[%s2 + $0xe8] sm:$0xff]
        %v671 = vld [vmem:[%s2 + $0xf0] sm:$0xff]
        %v672 = vld [vmem:[%s2 + $0xf8] sm:$0xff]
        %v674 = vlaneseq
        %v675 = vshrl.u32 %v674, 7
        %v676 = vsub.s32 0, %v675
        %v677 = vrot.slane %v640, %v676
        %679 = vmatprep.subr.mxu0 0.0
        %680 = vmatpush1.msra.mxu0 %v641
        %681 = vmatprep.subr.mxu0 0.0
        %682 = vmatpush1.msra.mxu0 %v642
        %683 = vmatprep.subr.mxu0 0.0
        %684 = vmatpush1.msra.mxu0 %v643
        %685 = vmatprep.subr.mxu0 0.0
        %686 = vmatpush1.msra.mxu0 %v644
        %687 = vmatprep.subr.mxu0 0.0
        %688 = vmatpush1.msra.mxu0 %v645
        %689 = vmatprep.subr.mxu0 0.0
        %690 = vmatpush1.msra.mxu0 %v646
        %691 = vmatprep.subr.mxu0 0.0
        %692 = vmatpush1.msra.mxu0 %v647
        %693 = vmatprep.subr.mxu0 0.0
        %694 = vmatpush1.msra.mxu0 %v648
        %695 = vmatprep.subr.mxu0 0.0
        %696 = vmatpush1.msra.mxu0 %v649
        %697 = vmatprep.subr.mxu0 0.0
        %698 = vmatpush1.msra.mxu0 %v650
        %699 = vmatprep.subr.mxu0 0.0
        %700 = vmatpush1.msra.mxu0 %v651
        %701 = vmatprep.subr.mxu0 0.0
        %702 = vmatpush1.msra.mxu0 %v652
        %703 = vmatprep.subr.mxu0 0.0
        %704 = vmatpush1.msra.mxu0 %v653
        %705 = vmatprep.subr.mxu0 0.0
        %706 = vmatpush1.msra.mxu0 %v654
        %707 = vmatprep.subr.mxu0 0.0
        %708 = vmatpush1.msra.mxu0 %v655
        %709 = vmatprep.subr.mxu0 0.0
        %710 = vmatpush1.msra.mxu0 %v656
        %711 = vmatprep.subr.mxu0 0.0
        %712 = vmatpush1.msra.mxu0 %v657
        %713 = vmatprep.subr.mxu0 0.0
        %714 = vmatpush1.msra.mxu0 %v658
        %715 = vmatprep.subr.mxu0 0.0
        %716 = vmatpush1.msra.mxu0 %v659
        %717 = vmatprep.subr.mxu0 0.0
        %718 = vmatpush1.msra.mxu0 %v660
        %719 = vmatprep.subr.mxu0 0.0
        %720 = vmatpush1.msra.mxu0 %v661
        %721 = vmatprep.subr.mxu0 0.0
        %722 = vmatpush1.msra.mxu0 %v662
        %723 = vmatprep.subr.mxu0 0.0
        %724 = vmatpush1.msra.mxu0 %v663
        %725 = vmatprep.subr.mxu0 0.0
        %726 = vmatpush1.msra.mxu0 %v664
        %727 = vmatprep.subr.mxu0 0.0
        %728 = vmatpush1.msra.mxu0 %v665
        %729 = vmatprep.subr.mxu0 0.0
        %730 = vmatpush1.msra.mxu0 %v666
        %731 = vmatprep.subr.mxu0 0.0
        %732 = vmatpush1.msra.mxu0 %v667
        %733 = vmatprep.subr.mxu0 0.0
        %734 = vmatpush1.msra.mxu0 %v668
        %735 = vmatprep.subr.mxu0 0.0
        %736 = vmatpush1.msra.mxu0 %v669
        %737 = vmatprep.subr.mxu0 0.0
        %738 = vmatpush1.msra.mxu0 %v670
        %739 = vmatprep.subr.mxu0 0.0
        %740 = vmatpush1.msra.mxu0 %v671
        %741 = vmatprep.subr.mxu0 0.0
        %742 = vmatpush1.msra.mxu0 %v672
        %743 = vmatprep.mubr.f32.mxu0 %v452
        %744 = vmatmul.mubr.f32.gmra.mrb[0].mxu0 %v450
        %v745 = vpop.f32.mrb[0].mxu0
        %v746 = vadd.f32 %v677, %v745
        %v747 = vpop.f32.mrb[0].mxu0
        %748 = vmatprep.mubr.f32.mxu0 %v458
        %749 = vmatmul.mubr.f32.gmra.mrb[0].mxu0 %v456
        %v750 = vpop.f32.mrb[0].mxu0
        %v751 = vadd.f32 %v677, %v750
        %v752 = vpop.f32.mrb[0].mxu0
        %753 = vmatprep.mubr.f32.mxu0 %v464
        %754 = vmatmul.mubr.f32.gmra.mrb[0].mxu0 %v462
        %v755 = vpop.f32.mrb[0].mxu0
        %v756 = vadd.f32 %v677, %v755
        %v757 = vpop.f32.mrb[0].mxu0
        %758 = vmatprep.mubr.f32.mxu0 %v470
        %759 = vmatmul.mubr.f32.gmra.mrb[0].mxu0 %v468
        %v760 = vpop.f32.mrb[0].mxu0
        %v761 = vadd.f32 %v677, %v760
        %v762 = vpop.f32.mrb[0].mxu0
        %763 = vmatprep.mubr.f32.mxu0 %v476
        %764 = vmatmul.mubr.f32.gmra.mrb[0].mxu0 %v474
        %v765 = vpop.f32.mrb[0].mxu0
        %v766 = vadd.f32 %v677, %v765
        %v767 = vpop.f32.mrb[0].mxu0
        %768 = vmatprep.mubr.f32.mxu0 %v482
        %769 = vmatmul.mubr.f32.gmra.mrb[0].mxu0 %v480
        %v770 = vpop.f32.mrb[0].mxu0
        %v771 = vadd.f32 %v677, %v770
        %v772 = vpop.f32.mrb[0].mxu0
        %773 = vmatprep.mubr.f32.mxu0 %v488
        %774 = vmatmul.mubr.f32.gmra.mrb[0].mxu0 %v486
        %v775 = vpop.f32.mrb[0].mxu0
        %v776 = vadd.f32 %v677, %v775
        %v777 = vpop.f32.mrb[0].mxu0
        %778 = vmatprep.mubr.f32.mxu0 %v494
        %779 = vmatmul.mubr.f32.gmra.mrb[0].mxu0 %v492
        %v780 = vpop.f32.mrb[0].mxu0
        %v781 = vadd.f32 %v677, %v780
        %v782 = vpop.f32.mrb[0].mxu0
        %783 = vmatprep.mubr.f32.mxu0 %v500
        %784 = vmatmul.mubr.f32.gmra.mrb[0].mxu0 %v498
        %v785 = vpop.f32.mrb[0].mxu0
        %v786 = vadd.f32 %v677, %v785
        %v787 = vpop.f32.mrb[0].mxu0
        %788 = vmatprep.mubr.f32.mxu0 %v506
        %789 = vmatmul.mubr.f32.gmra.mrb[0].mxu0 %v504
        %v790 = vpop.f32.mrb[0].mxu0
        %v791 = vadd.f32 %v677, %v790
        %v792 = vpop.f32.mrb[0].mxu0
        %793 = vmatprep.mubr.f32.mxu0 %v512
        %794 = vmatmul.mubr.f32.gmra.mrb[0].mxu0 %v510
        %v795 = vpop.f32.mrb[0].mxu0
        %v796 = vadd.f32 %v677, %v795
        %v797 = vpop.f32.mrb[0].mxu0
        %798 = vmatprep.mubr.f32.mxu0 %v518
        %799 = vmatmul.mubr.f32.gmra.mrb[0].mxu0 %v516
        %v800 = vpop.f32.mrb[0].mxu0
        %v801 = vadd.f32 %v677, %v800
        %v802 = vpop.f32.mrb[0].mxu0
        %803 = vmatprep.mubr.f32.mxu0 %v524
        %804 = vmatmul.mubr.f32.gmra.mrb[0].mxu0 %v522
        %v805 = vpop.f32.mrb[0].mxu0
        %v806 = vadd.f32 %v677, %v805
        %v807 = vpop.f32.mrb[0].mxu0
        %808 = vmatprep.mubr.f32.mxu0 %v530
        %809 = vmatmul.mubr.f32.gmra.mrb[0].mxu0 %v528
        %v810 = vpop.f32.mrb[0].mxu0
        %v811 = vadd.f32 %v677, %v810
        %v812 = vpop.f32.mrb[0].mxu0
        %813 = vmatprep.mubr.f32.mxu0 %v536
        %814 = vmatmul.mubr.f32.gmra.mrb[0].mxu0 %v534
        %v815 = vpop.f32.mrb[0].mxu0
        %v816 = vadd.f32 %v677, %v815
        %v817 = vpop.f32.mrb[0].mxu0
        %818 = vmatprep.mubr.f32.mxu0 %v542
        %819 = vmatmul.mubr.f32.gmra.mrb[0].mxu0 %v540
        %v820 = vpop.f32.mrb[0].mxu0
        %v821 = vadd.f32 %v677, %v820
        %v822 = vpop.f32.mrb[0].mxu0
        %823 = vmatprep.mubr.f32.mxu0 %v548
        %824 = vmatmul.mubr.f32.gmra.mrb[0].mxu0 %v546
        %v825 = vpop.f32.mrb[0].mxu0
        %v826 = vadd.f32 %v677, %v825
        %v827 = vpop.f32.mrb[0].mxu0
        %828 = vmatprep.mubr.f32.mxu0 %v554
        %829 = vmatmul.mubr.f32.gmra.mrb[0].mxu0 %v552
        %v830 = vpop.f32.mrb[0].mxu0
        %v831 = vadd.f32 %v677, %v830
        %v832 = vpop.f32.mrb[0].mxu0
        %833 = vmatprep.mubr.f32.mxu0 %v560
        %834 = vmatmul.mubr.f32.gmra.mrb[0].mxu0 %v558
        %v835 = vpop.f32.mrb[0].mxu0
        %v836 = vadd.f32 %v677, %v835
        %v837 = vpop.f32.mrb[0].mxu0
        %838 = vmatprep.mubr.f32.mxu0 %v566
        %839 = vmatmul.mubr.f32.gmra.mrb[0].mxu0 %v564
        %v840 = vpop.f32.mrb[0].mxu0
        %v841 = vadd.f32 %v677, %v840
        %v842 = vpop.f32.mrb[0].mxu0
        %843 = vmatprep.mubr.f32.mxu0 %v572
        %844 = vmatmul.mubr.f32.gmra.mrb[0].mxu0 %v570
        %v845 = vpop.f32.mrb[0].mxu0
        %v846 = vadd.f32 %v677, %v845
        %v847 = vpop.f32.mrb[0].mxu0
        %848 = vmatprep.mubr.f32.mxu0 %v578
        %849 = vmatmul.mubr.f32.gmra.mrb[0].mxu0 %v576
        %v850 = vpop.f32.mrb[0].mxu0
        %v851 = vadd.f32 %v677, %v850
        %v852 = vpop.f32.mrb[0].mxu0
        %853 = vmatprep.mubr.f32.mxu0 %v584
        %854 = vmatmul.mubr.f32.gmra.mrb[0].mxu0 %v582
        %v855 = vpop.f32.mrb[0].mxu0
        %v856 = vadd.f32 %v677, %v855
        %v857 = vpop.f32.mrb[0].mxu0
        %858 = vmatprep.mubr.f32.mxu0 %v590
        %859 = vmatmul.mubr.f32.gmra.mrb[0].mxu0 %v588
        %v860 = vpop.f32.mrb[0].mxu0
        %v861 = vadd.f32 %v677, %v860
        %v862 = vpop.f32.mrb[0].mxu0
        %863 = vmatprep.mubr.f32.mxu0 %v596
        %864 = vmatmul.mubr.f32.gmra.mrb[0].mxu0 %v594
        %v865 = vpop.f32.mrb[0].mxu0
        %v866 = vadd.f32 %v677, %v865
        %v867 = vpop.f32.mrb[0].mxu0
        %868 = vmatprep.mubr.f32.mxu0 %v602
        %869 = vmatmul.mubr.f32.gmra.mrb[0].mxu0 %v600
        %v870 = vpop.f32.mrb[0].mxu0
        %v871 = vadd.f32 %v677, %v870
        %v872 = vpop.f32.mrb[0].mxu0
        %873 = vmatprep.mubr.f32.mxu0 %v608
        %874 = vmatmul.mubr.f32.gmra.mrb[0].mxu0 %v606
        %v875 = vpop.f32.mrb[0].mxu0
        %v876 = vadd.f32 %v677, %v875
        %v877 = vpop.f32.mrb[0].mxu0
        %878 = vmatprep.mubr.f32.mxu0 %v614
        %879 = vmatmul.mubr.f32.gmra.mrb[0].mxu0 %v612
        %v880 = vpop.f32.mrb[0].mxu0
        %v881 = vadd.f32 %v677, %v880
        %v882 = vpop.f32.mrb[0].mxu0
        %883 = vmatprep.mubr.f32.mxu0 %v620
        %884 = vmatmul.mubr.f32.gmra.mrb[0].mxu0 %v618
        %v885 = vpop.f32.mrb[0].mxu0
        %v886 = vadd.f32 %v677, %v885
        %v887 = vpop.f32.mrb[0].mxu0
        %888 = vmatprep.mubr.f32.mxu0 %v626
        %889 = vmatmul.mubr.f32.gmra.mrb[0].mxu0 %v624
        %v890 = vpop.f32.mrb[0].mxu0
        %v891 = vadd.f32 %v677, %v890
        %v892 = vpop.f32.mrb[0].mxu0
        %893 = vmatprep.mubr.f32.mxu0 %v632
        %894 = vmatmul.mubr.f32.gmra.mrb[0].mxu0 %v630
        %v895 = vpop.f32.mrb[0].mxu0
        %v896 = vadd.f32 %v677, %v895
        %v897 = vpop.f32.mrb[0].mxu0
        %898 = vmatprep.mubr.f32.mxu0 %v638
        %899 = vmatmul.mubr.f32.gmra.mrb[0].mxu0 %v636
        %v900 = vpop.f32.mrb[0].mxu0
        %v901 = vadd.f32 %v677, %v900
        %v902 = vpop.f32.mrb[0].mxu0
        %903 = vdwg.mxu0
        %v904 = vld [vmem:[%s4 + $0x3] sm:$0x1]
        %v905 = vld [vmem:[%s3] sm:$0xff]
        %v906 = vld [vmem:[%s3 + $0x8] sm:$0xff]
        %v907 = vld [vmem:[%s3 + $0x10] sm:$0xff]
        %v908 = vld [vmem:[%s3 + $0x18] sm:$0xff]
        %v909 = vld [vmem:[%s3 + $0x20] sm:$0xff]
        %v910 = vld [vmem:[%s3 + $0x28] sm:$0xff]
        %v911 = vld [vmem:[%s3 + $0x30] sm:$0xff]
        %v912 = vld [vmem:[%s3 + $0x38] sm:$0xff]
        %v913 = vld [vmem:[%s3 + $0x40] sm:$0xff]
        %v914 = vld [vmem:[%s3 + $0x48] sm:$0xff]
        %v915 = vld [vmem:[%s3 + $0x50] sm:$0xff]
        %v916 = vld [vmem:[%s3 + $0x58] sm:$0xff]
        %v917 = vld [vmem:[%s3 + $0x60] sm:$0xff]
        %v918 = vld [vmem:[%s3 + $0x68] sm:$0xff]
        %v919 = vld [vmem:[%s3 + $0x70] sm:$0xff]
        %v920 = vld [vmem:[%s3 + $0x78] sm:$0xff]
        %v922 = vlaneseq
        %v923 = vshrl.u32 %v922, 7
        %v924 = vsub.s32 0, %v923
        %v925 = vrot.slane %v904, %v924
        %927 = vmatprep.subr.mxu0 0.0
        %928 = vmatpush1.msra.mxu0 %v905
        %929 = vmatprep.subr.mxu0 0.0
        %930 = vmatpush1.msra.mxu0 %v906
        %931 = vmatprep.subr.mxu0 0.0
        %932 = vmatpush1.msra.mxu0 %v907
        %933 = vmatprep.subr.mxu0 0.0
        %934 = vmatpush1.msra.mxu0 %v908
        %935 = vmatprep.subr.mxu0 0.0
        %936 = vmatpush1.msra.mxu0 %v909
        %937 = vmatprep.subr.mxu0 0.0
        %938 = vmatpush1.msra.mxu0 %v910
        %939 = vmatprep.subr.mxu0 0.0
        %940 = vmatpush1.msra.mxu0 %v911
        %941 = vmatprep.subr.mxu0 0.0
        %942 = vmatpush1.msra.mxu0 %v912
        %943 = vmatprep.subr.mxu0 0.0
        %944 = vmatpush1.msra.mxu0 %v913
        %945 = vmatprep.subr.mxu0 0.0
        %946 = vmatpush1.msra.mxu0 %v914
        %947 = vmatprep.subr.mxu0 0.0
        %948 = vmatpush1.msra.mxu0 %v915
        %949 = vmatprep.subr.mxu0 0.0
        %950 = vmatpush1.msra.mxu0 %v916
        %951 = vmatprep.subr.mxu0 0.0
        %952 = vmatpush1.msra.mxu0 %v917
        %953 = vmatprep.subr.mxu0 0.0
        %954 = vmatpush1.msra.mxu0 %v918
        %955 = vmatprep.subr.mxu0 0.0
        %956 = vmatpush1.msra.mxu0 %v919
        %957 = vmatprep.subr.mxu0 0.0
        %958 = vmatpush1.msra.mxu0 %v920
        %959 = vmatprep.subr.mxu0 0.0
        %960 = vmatpush1.msra.mxu0 0.0
        %961 = vmatprep.subr.mxu0 0.0
        %962 = vmatpush1.msra.mxu0 0.0
        %963 = vmatprep.subr.mxu0 0.0
        %964 = vmatpush1.msra.mxu0 0.0
        %965 = vmatprep.subr.mxu0 0.0
        %966 = vmatpush1.msra.mxu0 0.0
        %967 = vmatprep.subr.mxu0 0.0
        %968 = vmatpush1.msra.mxu0 0.0
        %969 = vmatprep.subr.mxu0 0.0
        %970 = vmatpush1.msra.mxu0 0.0
        %971 = vmatprep.subr.mxu0 0.0
        %972 = vmatpush1.msra.mxu0 0.0
        %973 = vmatprep.subr.mxu0 0.0
        %974 = vmatpush1.msra.mxu0 0.0
        %975 = vmatprep.subr.mxu0 0.0
        %976 = vmatpush1.msra.mxu0 0.0
        %977 = vmatprep.subr.mxu0 0.0
        %978 = vmatpush1.msra.mxu0 0.0
        %979 = vmatprep.subr.mxu0 0.0
        %980 = vmatpush1.msra.mxu0 0.0
        %981 = vmatprep.subr.mxu0 0.0
        %982 = vmatpush1.msra.mxu0 0.0
        %983 = vmatprep.subr.mxu0 0.0
        %984 = vmatpush1.msra.mxu0 0.0
        %985 = vmatprep.subr.mxu0 0.0
        %986 = vmatpush1.msra.mxu0 0.0
        %987 = vmatprep.subr.mxu0 0.0
        %988 = vmatpush1.msra.mxu0 0.0
        %989 = vmatprep.subr.mxu0 0.0
        %990 = vmatpush1.msra.mxu0 0.0
        %991 = vmatprep.mubr.f32.mxu0 0.0
        %992 = vmatmul.mubr.f32.gmra.mrb[0].mxu0 %v746
        %v993 = vpop.f32.mrb[0].mxu0
        %v994 = vadd.f32 %v925, %v993
        %v995 = vpop.f32.mrb[0].mxu0
        %996 = vmatprep.mubr.f32.mxu0 0.0
        %997 = vmatmul.mubr.f32.gmra.mrb[0].mxu0 %v751
        %v998 = vpop.f32.mrb[0].mxu0
        %v999 = vadd.f32 %v925, %v998
        %v1000 = vpop.f32.mrb[0].mxu0
        %1001 = vmatprep.mubr.f32.mxu0 0.0
        %1002 = vmatmul.mubr.f32.gmra.mrb[0].mxu0 %v756
        %v1003 = vpop.f32.mrb[0].mxu0
        %v1004 = vadd.f32 %v925, %v1003
        %v1005 = vpop.f32.mrb[0].mxu0
        %1006 = vmatprep.mubr.f32.mxu0 0.0
        %1007 = vmatmul.mubr.f32.gmra.mrb[0].mxu0 %v761
        %v1008 = vpop.f32.mrb[0].mxu0
        %v1009 = vadd.f32 %v925, %v1008
        %v1010 = vpop.f32.mrb[0].mxu0
        %1011 = vmatprep.mubr.f32.mxu0 0.0
        %1012 = vmatmul.mubr.f32.gmra.mrb[0].mxu0 %v766
        %v1013 = vpop.f32.mrb[0].mxu0
        %v1014 = vadd.f32 %v925, %v1013
        %v1015 = vpop.f32.mrb[0].mxu0
        %1016 = vmatprep.mubr.f32.mxu0 0.0
        %1017 = vmatmul.mubr.f32.gmra.mrb[0].mxu0 %v771
        %v1018 = vpop.f32.mrb[0].mxu0
        %v1019 = vadd.f32 %v925, %v1018
        %v1020 = vpop.f32.mrb[0].mxu0
        %1021 = vmatprep.mubr.f32.mxu0 0.0
        %1022 = vmatmul.mubr.f32.gmra.mrb[0].mxu0 %v776
        %v1023 = vpop.f32.mrb[0].mxu0
        %v1024 = vadd.f32 %v925, %v1023
        %v1025 = vpop.f32.mrb[0].mxu0
        %1026 = vmatprep.mubr.f32.mxu0 0.0
        %1027 = vmatmul.mubr.f32.gmra.mrb[0].mxu0 %v781
        %v1028 = vpop.f32.mrb[0].mxu0
        %v1029 = vadd.f32 %v925, %v1028
        %v1030 = vpop.f32.mrb[0].mxu0
        %1031 = vmatprep.mubr.f32.mxu0 0.0
        %1032 = vmatmul.mubr.f32.gmra.mrb[0].mxu0 %v786
        %v1033 = vpop.f32.mrb[0].mxu0
        %v1034 = vadd.f32 %v925, %v1033
        %v1035 = vpop.f32.mrb[0].mxu0
        %1036 = vmatprep.mubr.f32.mxu0 0.0
        %1037 = vmatmul.mubr.f32.gmra.mrb[0].mxu0 %v791
        %v1038 = vpop.f32.mrb[0].mxu0
        %v1039 = vadd.f32 %v925, %v1038
        %v1040 = vpop.f32.mrb[0].mxu0
        %1041 = vmatprep.mubr.f32.mxu0 0.0
        %1042 = vmatmul.mubr.f32.gmra.mrb[0].mxu0 %v796
        %v1043 = vpop.f32.mrb[0].mxu0
        %v1044 = vadd.f32 %v925, %v1043
        %v1045 = vpop.f32.mrb[0].mxu0
        %1046 = vmatprep.mubr.f32.mxu0 0.0
        %1047 = vmatmul.mubr.f32.gmra.mrb[0].mxu0 %v801
        %v1048 = vpop.f32.mrb[0].mxu0
        %v1049 = vadd.f32 %v925, %v1048
        %v1050 = vpop.f32.mrb[0].mxu0
        %1051 = vmatprep.mubr.f32.mxu0 0.0
        %1052 = vmatmul.mubr.f32.gmra.mrb[0].mxu0 %v806
        %v1053 = vpop.f32.mrb[0].mxu0
        %v1054 = vadd.f32 %v925, %v1053
        %v1055 = vpop.f32.mrb[0].mxu0
        %1056 = vmatprep.mubr.f32.mxu0 0.0
        %1057 = vmatmul.mubr.f32.gmra.mrb[0].mxu0 %v811
        %v1058 = vpop.f32.mrb[0].mxu0
        %v1059 = vadd.f32 %v925, %v1058
        %v1060 = vpop.f32.mrb[0].mxu0
        %1061 = vmatprep.mubr.f32.mxu0 0.0
        %1062 = vmatmul.mubr.f32.gmra.mrb[0].mxu0 %v816
        %v1063 = vpop.f32.mrb[0].mxu0
        %v1064 = vadd.f32 %v925, %v1063
        %v1065 = vpop.f32.mrb[0].mxu0
        %1066 = vmatprep.mubr.f32.mxu0 0.0
        %1067 = vmatmul.mubr.f32.gmra.mrb[0].mxu0 %v821
        %v1068 = vpop.f32.mrb[0].mxu0
        %v1069 = vadd.f32 %v925, %v1068
        %v1070 = vpop.f32.mrb[0].mxu0
        %1071 = vmatprep.mubr.f32.mxu0 0.0
        %1072 = vmatmul.mubr.f32.gmra.mrb[0].mxu0 %v826
        %v1073 = vpop.f32.mrb[0].mxu0
        %v1074 = vadd.f32 %v925, %v1073
        %v1075 = vpop.f32.mrb[0].mxu0
        %1076 = vmatprep.mubr.f32.mxu0 0.0
        %1077 = vmatmul.mubr.f32.gmra.mrb[0].mxu0 %v831
        %v1078 = vpop.f32.mrb[0].mxu0
        %v1079 = vadd.f32 %v925, %v1078
        %v1080 = vpop.f32.mrb[0].mxu0
        %1081 = vmatprep.mubr.f32.mxu0 0.0
        %1082 = vmatmul.mubr.f32.gmra.mrb[0].mxu0 %v836
        %v1083 = vpop.f32.mrb[0].mxu0
        %v1084 = vadd.f32 %v925, %v1083
        %v1085 = vpop.f32.mrb[0].mxu0
        %1086 = vmatprep.mubr.f32.mxu0 0.0
        %1087 = vmatmul.mubr.f32.gmra.mrb[0].mxu0 %v841
        %v1088 = vpop.f32.mrb[0].mxu0
        %v1089 = vadd.f32 %v925, %v1088
        %v1090 = vpop.f32.mrb[0].mxu0
        %1091 = vmatprep.mubr.f32.mxu0 0.0
        %1092 = vmatmul.mubr.f32.gmra.mrb[0].mxu0 %v846
        %v1093 = vpop.f32.mrb[0].mxu0
        %v1094 = vadd.f32 %v925, %v1093
        %v1095 = vpop.f32.mrb[0].mxu0
        %1096 = vmatprep.mubr.f32.mxu0 0.0
        %1097 = vmatmul.mubr.f32.gmra.mrb[0].mxu0 %v851
        %v1098 = vpop.f32.mrb[0].mxu0
        %v1099 = vadd.f32 %v925, %v1098
        %v1100 = vpop.f32.mrb[0].mxu0
        %1101 = vmatprep.mubr.f32.mxu0 0.0
        %1102 = vmatmul.mubr.f32.gmra.mrb[0].mxu0 %v856
        %v1103 = vpop.f32.mrb[0].mxu0
        %v1104 = vadd.f32 %v925, %v1103
        %v1105 = vpop.f32.mrb[0].mxu0
        %1106 = vmatprep.mubr.f32.mxu0 0.0
        %1107 = vmatmul.mubr.f32.gmra.mrb[0].mxu0 %v861
        %v1108 = vpop.f32.mrb[0].mxu0
        %v1109 = vadd.f32 %v925, %v1108
        %v1110 = vpop.f32.mrb[0].mxu0
        %1111 = vmatprep.mubr.f32.mxu0 0.0
        %1112 = vmatmul.mubr.f32.gmra.mrb[0].mxu0 %v866
        %v1113 = vpop.f32.mrb[0].mxu0
        %v1114 = vadd.f32 %v925, %v1113
        %v1115 = vpop.f32.mrb[0].mxu0
        %1116 = vmatprep.mubr.f32.mxu0 0.0
        %1117 = vmatmul.mubr.f32.gmra.mrb[0].mxu0 %v871
        %v1118 = vpop.f32.mrb[0].mxu0
        %v1119 = vadd.f32 %v925, %v1118
        %v1120 = vpop.f32.mrb[0].mxu0
        %1121 = vmatprep.mubr.f32.mxu0 0.0
        %1122 = vmatmul.mubr.f32.gmra.mrb[0].mxu0 %v876
        %v1123 = vpop.f32.mrb[0].mxu0
        %v1124 = vadd.f32 %v925, %v1123
        %v1125 = vpop.f32.mrb[0].mxu0
        %1126 = vmatprep.mubr.f32.mxu0 0.0
        %1127 = vmatmul.mubr.f32.gmra.mrb[0].mxu0 %v881
        %v1128 = vpop.f32.mrb[0].mxu0
        %v1129 = vadd.f32 %v925, %v1128
        %v1130 = vpop.f32.mrb[0].mxu0
        %1131 = vmatprep.mubr.f32.mxu0 0.0
        %1132 = vmatmul.mubr.f32.gmra.mrb[0].mxu0 %v886
        %v1133 = vpop.f32.mrb[0].mxu0
        %v1134 = vadd.f32 %v925, %v1133
        %v1135 = vpop.f32.mrb[0].mxu0
        %1136 = vmatprep.mubr.f32.mxu0 0.0
        %1137 = vmatmul.mubr.f32.gmra.mrb[0].mxu0 %v891
        %v1138 = vpop.f32.mrb[0].mxu0
        %v1139 = vadd.f32 %v925, %v1138
        %v1140 = vpop.f32.mrb[0].mxu0
        %1141 = vmatprep.mubr.f32.mxu0 0.0
        %1142 = vmatmul.mubr.f32.gmra.mrb[0].mxu0 %v896
        %v1143 = vpop.f32.mrb[0].mxu0
        %v1144 = vadd.f32 %v925, %v1143
        %v1145 = vpop.f32.mrb[0].mxu0
        %1146 = vmatprep.mubr.f32.mxu0 0.0
        %1147 = vmatmul.mubr.f32.gmra.mrb[0].mxu0 %v901
        %v1148 = vpop.f32.mrb[0].mxu0
        %v1149 = vadd.f32 %v925, %v1148
        %v1150 = vpop.f32.mrb[0].mxu0
        %1151 = vdwg.mxu0
        %1152 = vst [vmem:[%s218] sm:$0xff] %v994
        %1153 = vst [vmem:[%s218 + $0x8] sm:$0xff] %v999
        %1154 = vst [vmem:[%s218 + $0x10] sm:$0xff] %v1004
        %1155 = vst [vmem:[%s218 + $0x18] sm:$0xff] %v1009
        %1156 = vst [vmem:[%s218 + $0x20] sm:$0xff] %v1014
        %1157 = vst [vmem:[%s218 + $0x28] sm:$0xff] %v1019
        %1158 = vst [vmem:[%s218 + $0x30] sm:$0xff] %v1024
        %1159 = vst [vmem:[%s218 + $0x38] sm:$0xff] %v1029
        %1160 = vst [vmem:[%s218 + $0x40] sm:$0xff] %v1034
        %1161 = vst [vmem:[%s218 + $0x48] sm:$0xff] %v1039
        %1162 = vst [vmem:[%s218 + $0x50] sm:$0xff] %v1044
        %1163 = vst [vmem:[%s218 + $0x58] sm:$0xff] %v1049
        %1164 = vst [vmem:[%s218 + $0x60] sm:$0xff] %v1054
        %1165 = vst [vmem:[%s218 + $0x68] sm:$0xff] %v1059
        %1166 = vst [vmem:[%s218 + $0x70] sm:$0xff] %v1064
        %1167 = vst [vmem:[%s218 + $0x78] sm:$0xff] %v1069
        %1168 = vst [vmem:[%s218 + $0x80] sm:$0xff] %v1074
        %1169 = vst [vmem:[%s218 + $0x88] sm:$0xff] %v1079
        %1170 = vst [vmem:[%s218 + $0x90] sm:$0xff] %v1084
        %1171 = vst [vmem:[%s218 + $0x98] sm:$0xff] %v1089
        %1172 = vst [vmem:[%s218 + $0xa0] sm:$0xff] %v1094
        %1173 = vst [vmem:[%s218 + $0xa8] sm:$0xff] %v1099
        %1174 = vst [vmem:[%s218 + $0xb0] sm:$0xff] %v1104
        %1175 = vst [vmem:[%s218 + $0xb8] sm:$0xff] %v1109
        %1176 = vst [vmem:[%s218 + $0xc0] sm:$0xff] %v1114
        %1177 = vst [vmem:[%s218 + $0xc8] sm:$0xff] %v1119
        %1178 = vst [vmem:[%s218 + $0xd0] sm:$0xff] %v1124
        %1179 = vst [vmem:[%s218 + $0xd8] sm:$0xff] %v1129
        %1180 = vst [vmem:[%s218 + $0xe0] sm:$0xff] %v1134
        %1181 = vst [vmem:[%s218 + $0xe8] sm:$0xff] %v1139
        %1182 = vst [vmem:[%s218 + $0xf0] sm:$0xff] %v1144
        %1183 = vst [vmem:[%s218 + $0xf8] sm:$0xff] %v1149
        %s1184 = sand.u32 %s137, 1
        %s1185 = scalar_lea.sflag [#allocation3], %s1184
        %s1186 = sand.u32 %s137, 1
        %s1187 = smul.addr %s1186, 256
        %s1188 = scalar_lea.vmem [#allocation2], %s1187
        // Predicated region
        $region41: #{mlp_forward.1} parent=39 // pred_check
          %p1189 = pneg %p147
        $region42: #{mlp_forward.1} parent=39 // pred_check_branch
          %1191 = sbr.rel (%p1189) target = $region44
        $region43: #{mlp_forward.1} parent=39 // pred_region
          %s1192 = smul.u32 32, %s19
          %s1194 = ssub.s32 4096, 4096
          %1195 = vsyncadd %s1185, %s1194
          %s1196 = smul.addr %s1192, 128
          %s1197 = scalar_lea.hbm %s5, %s1196
          %s1198 = sshll.u32 %s1188, 4
          %s1199 = int_to_ptr.vmem [resolvable:$true] %s1198
          %1204 = dma.vmem_to_hbm [thread:$0]  %s1199, 4096, %s1197, %s1185, 128, 128, 8
        $region44: #{mlp_forward.1} parent=39 // pred_fallthru
          _
      $region40: #{mlp_forward.1} parent=5 // pred_fallthru
        _
      %p1205 = scmp.le.s32.totalorder 2, %s14
      // Predicated region
      $region45: #{mlp_forward.1} parent=5 // pred_check
        %p1206 = pneg %p1205
      $region46: #{mlp_forward.1} parent=5 // pred_check_branch
        %1208 = sbr.rel (%p1206) target = $region48
      $region47: #{mlp_forward.1} parent=5 // pred_region
        %s1209 = ssub.s32 %s14, 2
        // Predicated region
        $region49: #{mlp_forward.1} parent=47 // pred_check
          %p1210 = pneg %p153
        $region50: #{mlp_forward.1} parent=47 // pred_check_branch
          %1212 = sbr.rel (%p1210) target = $region52
        $region51: #{mlp_forward.1} parent=47 // pred_region
          %s1213 = sand.u32 %s138, 1
          %s1214 = scalar_lea.sflag [#allocation3], %s1213
          %s1215 = sand.u32 %s138, 1
          %s1216 = smul.addr %s1215, 256
          %s1217 = scalar_lea.vmem [#allocation2], %s1216
          %1218 = dma.done %s1214, 4096
        $region52: #{mlp_forward.1} parent=47 // pred_fallthru
          _
      $region48: #{mlp_forward.1} parent=5 // pred_fallthru
        _
    $region6: #{mlp_forward.1} parent=1 // loop_footer
      %s18 = sadd.s32 1, %s14
    $region7: #{mlp_forward.1} parent=1 // loop_footer_branch
      %13 = sbr.rel target = $region3
    $region8: #{mlp_forward.1} parent=1 // loop_exit
      _
    %1219 = vsyncpa [#allocation3], 1
    %s1220 = scalar_lea.sflag [#allocation3], 1
    %1221 = vsyncpa %s1220, 1

</llo_original>
